<compile_context>
chip_gen: v7x
topology: tpu7x:2x2x1
jax: 0.10.0
libtpu: 0.0.40
codegen_flags: <defaults>
</compile_context>

<pallas_src>
import jax
import jax.numpy as jnp
from jax.experimental import pallas as pl
from jax.experimental.pallas import tpu as pltpu


def _spw_kernel(u_ref, it_ref, w1_ref, b1_ref, w2_ref, b2_ref,
                w3u_ref, w3i_ref, b3_ref, w4d_ref, b4d_ref, out_ref):
    # Layers 1/2: per-branch (TB,H)@(H,H) dots, f32 accumulation + f32 epilogue.
    u = jnp.dot(u_ref[...], w1_ref[...], preferred_element_type=jnp.float32)
    u = jnp.maximum(u + b1_ref[...], 0.0)                              # (TB, H) f32
    it = jnp.dot(it_ref[...], w2_ref[...], preferred_element_type=jnp.float32)
    it = jnp.maximum(it + b2_ref[...], 0.0)                            # (TB, H) f32

    # Layer 3 on the implicit concat: [u | it] @ W3^T == u @ W3u + it @ W3i.
    a = (jnp.dot(u.astype(w3u_ref.dtype), w3u_ref[...],
                 preferred_element_type=jnp.float32)
         + jnp.dot(it.astype(w3i_ref.dtype), w3i_ref[...],
                   preferred_element_type=jnp.float32)
         + b3_ref[...])
    a = jnp.maximum(a, 0.0)                                            # (TB, H) f32

    # Layer 4 + 2-class softmax closed form: d = l1 - l0, p1 = sigmoid(d).
    d = jnp.dot(a.astype(w4d_ref.dtype), w4d_ref[...],
                preferred_element_type=jnp.float32) + b4d_ref[...]     # (TB, 1)
    out_ref[...] = (1.0 / (1.0 + jnp.exp(-d))).astype(out_ref.dtype)   # EUP exp only


def sequential_preference_weight(user_embedding, item_embedding, params, *,
                                 compute_dtype=jnp.bfloat16,
                                 block_b=1024, min_grid_steps=8):
    """params: PyTorch-convention weights W{1..4}_w [out, in], W{1..4}_b [out]."""
    B, H = user_embedding.shape
    f32 = jnp.float32
    cdt = compute_dtype

    # ---- wrapper-side weight prep (tiny, trace-time) ----
    u_in = user_embedding.astype(cdt)
    i_in = item_embedding.astype(cdt)

    w1t = params["W1_w"].T.astype(cdt)                     # (H, H)  [in, out]
    w2t = params["W2_w"].T.astype(cdt)                     # (H, H)
    b1 = params["W1_b"].reshape(1, H).astype(f32)
    b2 = params["W2_b"].reshape(1, H).astype(f32)

    w3t = params["W3_w"].T.astype(cdt)                     # (2H, H)
    w3u = w3t[:H]                                          # (H, H) — acts on u
    w3i = w3t[H:]                                          # (H, H) — acts on i
    b3 = params["W3_b"].reshape(1, H).astype(f32)

    w4t = params["W4_w"].T.astype(f32)                     # (H, 2)
    w4d = (w4t[:, 1:2] - w4t[:, 0:1]).astype(cdt)          # (H, 1): column diff
    b4d = (params["W4_b"][1] - params["W4_b"][0]).reshape(1, 1).astype(f32)

    # ---- batch tile: multiple of 8 sublanes, aim for >= min_grid_steps steps ----
    tb = min(int(block_b), pl.cdiv(B, min_grid_steps))
    tb = max(8, ((tb + 7) // 8) * 8)
    grid = (pl.cdiv(B, tb),)

    csize = jnp.dtype(cdt).itemsize
    weight_bytes = (4 * H * H + H) * csize + (3 * H + 2) * 4           # W1,W2,W3u,W3i,W4d + biases
    stream_bytes = 2 * (2 * tb * H * csize)                            # user+item, double-buffered
    out_bytes = 2 * tb * 4                                             # (tb,1) f32, double-buffered
    vmem_limit = int(min(max(2 * (weight_bytes + stream_bytes + out_bytes) + (8 << 20),
                             32 << 20), 64 << 20))

    cost = pl.CostEstimate(
        flops=B * (8 * H * H + 2 * H),
        transcendentals=B,
        bytes_accessed=(2 * B * H * csize + B * 4 + weight_bytes),
    )

    def const(shape):
        return pl.BlockSpec(shape, lambda i: (0, 0))       # resident weights/biases

    p1 = pl.pallas_call(
        _spw_kernel,
        out_shape=jax.ShapeDtypeStruct((B, 1), f32),
        grid=grid,
        in_specs=[
            pl.BlockSpec((tb, H), lambda i: (i, 0)),        # user stream
            pl.BlockSpec((tb, H), lambda i: (i, 0)),        # item stream
            const((H, H)), const((1, H)),                   # W1^T, b1
            const((H, H)), const((1, H)),                   # W2^T, b2
            const((H, H)), const((H, H)), const((1, H)),    # W3u, W3i, b3
            const((H, 1)), const((1, 1)),                   # W4 column diff, b4 diff
        ],
        out_specs=pl.BlockSpec((tb, 1), lambda i: (i, 0)),
        compiler_params=pltpu.CompilerParams(
            dimension_semantics=("parallel",),
            vmem_limit_bytes=vmem_limit),
        cost_estimate=cost,
    )(u_in, i_in, w1t, b1, w2t, b2, w3u, w3i, b3, w4d, b4d)

    # Expand the single sigmoid column to the full 2-class softmax output.
    return jnp.concatenate([1.0 - p1, p1], axis=1)


def _reference(user, item, params):
    """Pure-JAX reference matching the PyTorch forward."""
    def lin(x, w, b):
        return x @ w.T + b
    u = jax.nn.relu(lin(user, params["W1_w"], params["W1_b"]))
    it = jax.nn.relu(lin(item, params["W2_w"], params["W2_b"]))
    c = jnp.concatenate([u, it], axis=1)
    a = jax.nn.relu(lin(c, params["W3_w"], params["W3_b"]))
    a = lin(a, params["W4_w"], params["W4_b"])
    return jax.nn.softmax(a, axis=1)


if __name__ == "__main__":
    B, H = 200, 32            # non-multiple-of-tile batch exercises the partial tail tile
    key = jax.random.PRNGKey(0)
    ks = jax.random.split(key, 10)

    # Deterministic synthetic parameters (PyTorch Linear convention: W [out, in]).
    params = {
        "W1_w": jax.random.normal(ks[0], (H, H), jnp.float32) * 0.1,
        "W1_b": jax.random.normal(ks[1], (H,), jnp.float32) * 0.1,
        "W2_w": jax.random.normal(ks[2], (H, H), jnp.float32) * 0.1,
        "W2_b": jax.random.normal(ks[3], (H,), jnp.float32) * 0.1,
        "W3_w": jax.random.normal(ks[4], (H, 2 * H), jnp.float32) * 0.1,
        "W3_b": jax.random.normal(ks[5], (H,), jnp.float32) * 0.1,
        "W4_w": jax.random.normal(ks[6], (2, H), jnp.float32) * 0.1,
        "W4_b": jax.random.normal(ks[7], (2,), jnp.float32) * 0.1,
    }
    user = jax.random.normal(ks[8], (B, H), jnp.float32)
    item = jax.random.normal(ks[9], (B, H), jnp.float32)

    ref = _reference(user, item, params)

    # Exactness check: f32 compute path (block_b small to force a multi-step grid).
    out_f32 = sequential_preference_weight(user, item, params,
                                           compute_dtype=jnp.float32, block_b=64)
    out_f32 = jax.block_until_ready(out_f32)
    assert out_f32.shape == (B, 2)
    assert jnp.allclose(out_f32, ref, atol=1e-5, rtol=1e-5)
    assert jnp.allclose(jnp.sum(out_f32, axis=1), 1.0, atol=1e-6)

    # Default (bf16-streamed) path: looser tolerance is expected precision loss.
    out_bf16 = sequential_preference_weight(user, item, params, block_b=64)
    out_bf16 = jax.block_until_ready(out_bf16)
    assert out_bf16.shape == (B, 2)
    assert jnp.allclose(out_bf16, ref, atol=2e-2, rtol=2e-2)
    assert jnp.allclose(jnp.sum(out_bf16, axis=1), 1.0, atol=1e-6)

    print("KERNEL_OK")
</pallas_src>

<mosaic_0001>
module attributes {stable_mosaic.version = 11 : i64} {
  func.func @_spw_kernel(%arg0: i32, %arg1: memref<32x32xf32, #tpu.memory_space<vmem>>, %arg2: memref<32x32xf32, #tpu.memory_space<vmem>>, %arg3: memref<32x32xf32, #tpu.memory_space<vmem>>, %arg4: memref<1x32xf32, #tpu.memory_space<vmem>>, %arg5: memref<32x32xf32, #tpu.memory_space<vmem>>, %arg6: memref<1x32xf32, #tpu.memory_space<vmem>>, %arg7: memref<32x32xf32, #tpu.memory_space<vmem>>, %arg8: memref<32x32xf32, #tpu.memory_space<vmem>>, %arg9: memref<1x32xf32, #tpu.memory_space<vmem>>, %arg10: memref<32x1xf32, #tpu.memory_space<vmem>>, %arg11: memref<1x1xf32, #tpu.memory_space<vmem>>, %arg12: memref<32x1xf32, #tpu.memory_space<vmem>>) attributes {dimension_semantics = [#tpu.dimension_semantics<parallel>], iteration_bounds = array<i64: 7>, scalar_prefetch = 0 : i64, scratch_operands = 0 : i64, tpu.core_type = #tpu.core_type<tc>, window_params = [{transform_indices = @transform_0, window_bounds = array<i64: 32, 32>}, {transform_indices = @transform_1, window_bounds = array<i64: 32, 32>}, {pipeline_mode = #tpu.pipeline_mode<synchronous>, transform_indices = @transform_2, window_bounds = array<i64: 32, 32>}, {pipeline_mode = #tpu.pipeline_mode<synchronous>, transform_indices = @transform_3, window_bounds = array<i64: 1, 32>}, {pipeline_mode = #tpu.pipeline_mode<synchronous>, transform_indices = @transform_4, window_bounds = array<i64: 32, 32>}, {pipeline_mode = #tpu.pipeline_mode<synchronous>, transform_indices = @transform_5, window_bounds = array<i64: 1, 32>}, {pipeline_mode = #tpu.pipeline_mode<synchronous>, transform_indices = @transform_6, window_bounds = array<i64: 32, 32>}, {pipeline_mode = #tpu.pipeline_mode<synchronous>, transform_indices = @transform_7, window_bounds = array<i64: 32, 32>}, {pipeline_mode = #tpu.pipeline_mode<synchronous>, transform_indices = @transform_8, window_bounds = array<i64: 1, 32>}, {pipeline_mode = #tpu.pipeline_mode<synchronous>, transform_indices = @transform_9, window_bounds = array<i64: 32, 1>}, {pipeline_mode = #tpu.pipeline_mode<synchronous>, transform_indices = @transform_10, window_bounds = array<i64: 1, 1>}, {transform_indices = @transform_11, window_bounds = array<i64: 32, 1>}]} {
    %c0 = arith.constant 0 : index
    %c0_0 = arith.constant 0 : index
    %0 = vector.load %arg1[%c0, %c0_0] : memref<32x32xf32, #tpu.memory_space<vmem>>, vector<32x32xf32>
    %c0_1 = arith.constant 0 : index
    %c0_2 = arith.constant 0 : index
    %1 = vector.load %arg3[%c0_1, %c0_2] : memref<32x32xf32, #tpu.memory_space<vmem>>, vector<32x32xf32>
    %cst = arith.constant dense<0.000000e+00> : vector<32x32xf32>
    %2 = tpu.matmul %0, %1, %cst {dimension_numbers = #tpu.dot_dimension_numbers<[1], [0], [0], [1], [0, 0, 1, 1], [], []>} : vector<32x32xf32>, vector<32x32xf32>, vector<32x32xf32> -> vector<32x32xf32>
    %c0_3 = arith.constant 0 : index
    %c0_4 = arith.constant 0 : index
    %3 = vector.load %arg4[%c0_3, %c0_4] : memref<1x32xf32, #tpu.memory_space<vmem>>, vector<1x32xf32>
    %4 = vector.broadcast %3 : vector<1x32xf32> to vector<32x32xf32>
    %5 = arith.addf %2, %4 : vector<32x32xf32>
    %cst_5 = arith.constant 0.000000e+00 : f32
    %6 = vector.broadcast %cst_5 : f32 to vector<32x32xf32>
    %7 = arith.maximumf %5, %6 : vector<32x32xf32>
    %c0_6 = arith.constant 0 : index
    %c0_7 = arith.constant 0 : index
    %8 = vector.load %arg2[%c0_6, %c0_7] : memref<32x32xf32, #tpu.memory_space<vmem>>, vector<32x32xf32>
    %c0_8 = arith.constant 0 : index
    %c0_9 = arith.constant 0 : index
    %9 = vector.load %arg5[%c0_8, %c0_9] : memref<32x32xf32, #tpu.memory_space<vmem>>, vector<32x32xf32>
    %cst_10 = arith.constant dense<0.000000e+00> : vector<32x32xf32>
    %10 = tpu.matmul %8, %9, %cst_10 {dimension_numbers = #tpu.dot_dimension_numbers<[1], [0], [0], [1], [0, 0, 1, 1], [], []>} : vector<32x32xf32>, vector<32x32xf32>, vector<32x32xf32> -> vector<32x32xf32>
    %c0_11 = arith.constant 0 : index
    %c0_12 = arith.constant 0 : index
    %11 = vector.load %arg6[%c0_11, %c0_12] : memref<1x32xf32, #tpu.memory_space<vmem>>, vector<1x32xf32>
    %12 = vector.broadcast %11 : vector<1x32xf32> to vector<32x32xf32>
    %13 = arith.addf %10, %12 : vector<32x32xf32>
    %cst_13 = arith.constant 0.000000e+00 : f32
    %14 = vector.broadcast %cst_13 : f32 to vector<32x32xf32>
    %15 = arith.maximumf %13, %14 : vector<32x32xf32>
    %c0_14 = arith.constant 0 : index
    %c0_15 = arith.constant 0 : index
    %16 = vector.load %arg7[%c0_14, %c0_15] : memref<32x32xf32, #tpu.memory_space<vmem>>, vector<32x32xf32>
    %cst_16 = arith.constant dense<0.000000e+00> : vector<32x32xf32>
    %17 = tpu.matmul %7, %16, %cst_16 {dimension_numbers = #tpu.dot_dimension_numbers<[1], [0], [0], [1], [0, 0, 1, 1], [], []>} : vector<32x32xf32>, vector<32x32xf32>, vector<32x32xf32> -> vector<32x32xf32>
    %c0_17 = arith.constant 0 : index
    %c0_18 = arith.constant 0 : index
    %18 = vector.load %arg8[%c0_17, %c0_18] : memref<32x32xf32, #tpu.memory_space<vmem>>, vector<32x32xf32>
    %cst_19 = arith.constant dense<0.000000e+00> : vector<32x32xf32>
    %19 = tpu.matmul %15, %18, %cst_19 {dimension_numbers = #tpu.dot_dimension_numbers<[1], [0], [0], [1], [0, 0, 1, 1], [], []>} : vector<32x32xf32>, vector<32x32xf32>, vector<32x32xf32> -> vector<32x32xf32>
    %20 = arith.addf %17, %19 : vector<32x32xf32>
    %c0_20 = arith.constant 0 : index
    %c0_21 = arith.constant 0 : index
    %21 = vector.load %arg9[%c0_20, %c0_21] : memref<1x32xf32, #tpu.memory_space<vmem>>, vector<1x32xf32>
    %22 = vector.broadcast %21 : vector<1x32xf32> to vector<32x32xf32>
    %23 = arith.addf %20, %22 : vector<32x32xf32>
    %cst_22 = arith.constant 0.000000e+00 : f32
    %24 = vector.broadcast %cst_22 : f32 to vector<32x32xf32>
    %25 = arith.maximumf %23, %24 : vector<32x32xf32>
    %c0_23 = arith.constant 0 : index
    %c0_24 = arith.constant 0 : index
    %26 = vector.load %arg10[%c0_23, %c0_24] : memref<32x1xf32, #tpu.memory_space<vmem>>, vector<32x1xf32>
    %cst_25 = arith.constant dense<0.000000e+00> : vector<32x1xf32>
    %27 = tpu.matmul %25, %26, %cst_25 {dimension_numbers = #tpu.dot_dimension_numbers<[1], [0], [0], [1], [0, 0, 1, 1], [], []>} : vector<32x32xf32>, vector<32x1xf32>, vector<32x1xf32> -> vector<32x1xf32>
    %c0_26 = arith.constant 0 : index
    %c0_27 = arith.constant 0 : index
    %28 = vector.load %arg11[%c0_26, %c0_27] : memref<1x1xf32, #tpu.memory_space<vmem>>, vector<1x1xf32>
    %29 = vector.broadcast %28 : vector<1x1xf32> to vector<32x1xf32>
    %30 = arith.addf %27, %29 : vector<32x1xf32>
    %cst_28 = arith.constant 0.000000e+00 : f32
    %31 = vector.broadcast %cst_28 : f32 to vector<32x1xf32>
    %32 = arith.subf %31, %30 : vector<32x1xf32>
    %33 = math.exp %32 : vector<32x1xf32>
    %cst_29 = arith.constant 1.000000e+00 : f32
    %34 = vector.broadcast %cst_29 : f32 to vector<32x1xf32>
    %35 = arith.addf %34, %33 : vector<32x1xf32>
    %cst_30 = arith.constant 1.000000e+00 : f32
    %36 = vector.broadcast %cst_30 : f32 to vector<32x1xf32>
    %37 = arith.divf %36, %35 : vector<32x1xf32>
    %c0_31 = arith.constant 0 : index
    %c0_32 = arith.constant 0 : index
    %38 = vector.load %arg12[%c0_31, %c0_32] : memref<32x1xf32, #tpu.memory_space<vmem>>, vector<32x1xf32>
    tpu.vector_store %arg12[%c0_31, %c0_32], %37 {strides = array<i32>} : memref<32x1xf32, #tpu.memory_space<vmem>>, vector<32x1xf32>,
    return
  }
  func.func @transform_0(%arg0: i32) -> (i32, i32) {
    %c0_i32 = arith.constant 0 : i32
    %c0_i32_0 = arith.constant 0 : i32
    return %arg0, %c0_i32 : i32, i32
  }
  func.func @transform_1(%arg0: i32) -> (i32, i32) {
    %c0_i32 = arith.constant 0 : i32
    %c0_i32_0 = arith.constant 0 : i32
    return %arg0, %c0_i32 : i32, i32
  }
  func.func @transform_2(%arg0: i32) -> (i32, i32) {
    %c0_i32 = arith.constant 0 : i32
    %c0_i32_0 = arith.constant 0 : i32
    %c0_i32_1 = arith.constant 0 : i32
    return %c0_i32, %c0_i32_0 : i32, i32
  }
  func.func @transform_3(%arg0: i32) -> (i32, i32) {
    %c0_i32 = arith.constant 0 : i32
    %c0_i32_0 = arith.constant 0 : i32
    %c0_i32_1 = arith.constant 0 : i32
    return %c0_i32, %c0_i32_0 : i32, i32
  }
  func.func @transform_4(%arg0: i32) -> (i32, i32) {
    %c0_i32 = arith.constant 0 : i32
    %c0_i32_0 = arith.constant 0 : i32
    %c0_i32_1 = arith.constant 0 : i32
    return %c0_i32, %c0_i32_0 : i32, i32
  }
  func.func @transform_5(%arg0: i32) -> (i32, i32) {
    %c0_i32 = arith.constant 0 : i32
    %c0_i32_0 = arith.constant 0 : i32
    %c0_i32_1 = arith.constant 0 : i32
    return %c0_i32, %c0_i32_0 : i32, i32
  }
  func.func @transform_6(%arg0: i32) -> (i32, i32) {
    %c0_i32 = arith.constant 0 : i32
    %c0_i32_0 = arith.constant 0 : i32
    %c0_i32_1 = arith.constant 0 : i32
    return %c0_i32, %c0_i32_0 : i32, i32
  }
  func.func @transform_7(%arg0: i32) -> (i32, i32) {
    %c0_i32 = arith.constant 0 : i32
    %c0_i32_0 = arith.constant 0 : i32
    %c0_i32_1 = arith.constant 0 : i32
    return %c0_i32, %c0_i32_0 : i32, i32
  }
  func.func @transform_8(%arg0: i32) -> (i32, i32) {
    %c0_i32 = arith.constant 0 : i32
    %c0_i32_0 = arith.constant 0 : i32
    %c0_i32_1 = arith.constant 0 : i32
    return %c0_i32, %c0_i32_0 : i32, i32
  }
  func.func @transform_9(%arg0: i32) -> (i32, i32) {
    %c0_i32 = arith.constant 0 : i32
    %c0_i32_0 = arith.constant 0 : i32
    %c0_i32_1 = arith.constant 0 : i32
    return %c0_i32, %c0_i32_0 : i32, i32
  }
  func.func @transform_10(%arg0: i32) -> (i32, i32) {
    %c0_i32 = arith.constant 0 : i32
    %c0_i32_0 = arith.constant 0 : i32
    %c0_i32_1 = arith.constant 0 : i32
    return %c0_i32, %c0_i32_0 : i32, i32
  }
  func.func @transform_11(%arg0: i32) -> (i32, i32) {
    %c0_i32 = arith.constant 0 : i32
    %c0_i32_0 = arith.constant 0 : i32
    return %arg0, %c0_i32 : i32, i32
  }
}

</mosaic_0001>

<llo_original>
// kernel: tpu_custom_call.1
$region0: #{tpu_custom_call.1}
  #allocation0 [shape = 'u32[]', space=smem, size = 0x4, offset = 0x4, fixed_abs, tag = 'smem constant byte address 0x4 - core index']
  #allocation1 [shape = 'u32[144,128]{1,0:T(1,128)}', space=vmem, size = 0x12000, scoped, tag = 'internal scratch']
  #allocation2 [shape = 'f32[1,1]{1,0:T(1,128)S(1)}', space=vmem, size = 0x200, scoped, tag = 'scoped memory for tpu_custom_call.1']
  %s0 = inlined_call_operand.vmem [shape: f32[200,32], index: 0, kind: input, shape index: {}]
  %s1 = inlined_call_operand.vmem [shape: f32[200,32], index: 1, kind: input, shape index: {}]
  %s2 = inlined_call_operand.vmem [shape: f32[32,32], index: 2, kind: input, shape index: {}]
  %s3 = inlined_call_operand.vmem [shape: f32[1,32], index: 3, kind: input, shape index: {}]
  %s4 = inlined_call_operand.vmem [shape: f32[32,32], index: 4, kind: input, shape index: {}]
  %s5 = inlined_call_operand.vmem [shape: f32[1,32], index: 5, kind: input, shape index: {}]
  %s6 = inlined_call_operand.vmem [shape: f32[32,32], index: 6, kind: input, shape index: {}]
  %s7 = inlined_call_operand.vmem [shape: f32[32,32], index: 7, kind: input, shape index: {}]
  %s8 = inlined_call_operand.vmem [shape: f32[1,32], index: 8, kind: input, shape index: {}]
  %s9 = inlined_call_operand.vmem [shape: f32[32,1], index: 9, kind: input, shape index: {}]
  %s10 = inlined_call_operand.<no memory space> [shape: f32[1,1], index: 10, kind: input, shape index: {}]
  %s11 = inlined_call_operand.vmem [shape: f32[200,1], index: 11, kind: output, shape index: {}]
  %s12 = sld [smem:[#allocation0]]
  $region125: #{tpu_custom_call.1} parent=0
    _
  %s14 = ssub.s32 1, %s12
  %s15 = scalar_select 0, %s14, %s12
  %v16 = vstv %s10
  %17 = vst [vmem:[#allocation2] sm:$0x1] %v16
  $region1: #{tpu_custom_call.1} parent=0
    #allocation3 [shape = 'u8[32768]{0}', space=vmem, size = 0x8000, scoped, tag = 'output window, operand 0']
    loop: start=0, step=1, limit=9
    $region2: #{tpu_custom_call.1} parent=1 // loop_pre_header
      _
    $region3: #{tpu_custom_call.1} parent=1 // loop_header
      %s19 = sphi 0, %s23
      %p20 = scmp.ge.s32.totalorder %s19, 9
      %s29 = sphi 0, %s31
      %s32 = sphi 0, %s29
      %s33 = sphi 0, %s32
      %s49 = sphi 0, %s33
      %s55 = sphi 0, %s57
      %s58 = sphi 0, %s55
      %s59 = sphi 0, %s58
      %s75 = sphi 0, %s59
      %s79 = sphi 0, %s79
      %s81 = sphi 0, %s79
      %s82 = sphi 0, %s81
      %s96 = sphi 0, %s82
      %s100 = sphi 0, %s100
      %s102 = sphi 0, %s100
      %s103 = sphi 0, %s102
      %s117 = sphi 0, %s103
      %s121 = sphi 0, %s121
      %s123 = sphi 0, %s121
      %s124 = sphi 0, %s123
      %s138 = sphi 0, %s124
      %s142 = sphi 0, %s142
      %s144 = sphi 0, %s142
      %s145 = sphi 0, %s144
      %s159 = sphi 0, %s145
      %s163 = sphi 0, %s163
      %s165 = sphi 0, %s163
      %s166 = sphi 0, %s165
      %s180 = sphi 0, %s166
      %s184 = sphi 0, %s184
      %s186 = sphi 0, %s184
      %s187 = sphi 0, %s186
      %s201 = sphi 0, %s187
      %s205 = sphi 0, %s205
      %s207 = sphi 0, %s205
      %s208 = sphi 0, %s207
      %s222 = sphi 0, %s208
      %s226 = sphi 0, %s226
      %s228 = sphi 0, %s226
      %s229 = sphi 0, %s228
      %s243 = sphi 0, %s229
      %s247 = sphi 0, %s247
      %s249 = sphi 0, %s247
      %s250 = sphi 0, %s249
      %s264 = sphi 0, %s250
      %s270 = sphi 0, %s272
      %s273 = sphi 0, %s270
      %s274 = sphi 0, %s273
      %s290 = sphi 0, %s274
    $region4: #{tpu_custom_call.1} parent=1 // loop_header_branch
      %22 = sbr.rel (%p20) target = $region8
    $region5: #{tpu_custom_call.1} parent=1 // loop_body
      %s24 = ssub.s32 %s19, 1
      %s25 = ssub.s32 %s19, 2
      %s26 = sadd.s32 %s19, 1
      %s27 = ssub.s32 %s19, %s26
      %p28 = scmp.eq.s32.totalorder %s27, 0
      %s30 = sadd.s32 %s29, 1
      %s31 = scalar_select %p28, %s29, %s30
      %p34 = pneg %p28
      %p35 = scmp.eq.s32.totalorder %s19, 6
      %p36 = por %p34, %p35
      %p37 = scmp.ne.s32.totalorder %s29, %s32
      %p38 = scmp.eq.s32.totalorder %s19, 0
      %p39 = por %p37, %p38
      %p40 = scmp.ne.s32.totalorder %s29, %s32
      %p41 = scmp.eq.s32.totalorder %s24, 6
      %p42 = por %p40, %p41
      %p43 = scmp.ne.s32.totalorder %s32, %s33
      %p44 = scmp.eq.s32.totalorder %s24, 0
      %p45 = por %p43, %p44
      %p46 = scmp.ne.s32.totalorder %s32, %s33
      %p47 = scmp.eq.s32.totalorder %s25, 6
      %p48 = por %p46, %p47
      %p50 = scmp.ne.s32.totalorder %s33, %s49
      %p51 = scmp.eq.s32.totalorder %s25, 0
      %p52 = por %p50, %p51
      %s53 = ssub.s32 %s19, %s26
      %p54 = scmp.eq.s32.totalorder %s53, 0
      %s56 = sadd.s32 %s55, 1
      %s57 = scalar_select %p54, %s55, %s56
      %p60 = pneg %p54
      %p61 = scmp.eq.s32.totalorder %s19, 6
      %p62 = por %p60, %p61
      %p63 = scmp.ne.s32.totalorder %s55, %s58
      %p64 = scmp.eq.s32.totalorder %s19, 0
      %p65 = por %p63, %p64
      %p66 = scmp.ne.s32.totalorder %s55, %s58
      %p67 = scmp.eq.s32.totalorder %s24, 6
      %p68 = por %p66, %p67
      %p69 = scmp.ne.s32.totalorder %s58, %s59
      %p70 = scmp.eq.s32.totalorder %s24, 0
      %p71 = por %p69, %p70
      %p72 = scmp.ne.s32.totalorder %s58, %s59
      %p73 = scmp.eq.s32.totalorder %s25, 6
      %p74 = por %p72, %p73
      %p76 = scmp.ne.s32.totalorder %s59, %s75
      %p77 = scmp.eq.s32.totalorder %s25, 0
      %p78 = por %p76, %p77
      %s80 = sadd.s32 %s79, 1
      %p83 = scmp.eq.s32.totalorder %s19, 6
      %p84 = scmp.ne.s32.totalorder %s79, %s81
      %p85 = scmp.eq.s32.totalorder %s19, 0
      %p86 = por %p84, %p85
      %p87 = scmp.ne.s32.totalorder %s79, %s81
      %p88 = scmp.eq.s32.totalorder %s24, 6
      %p89 = por %p87, %p88
      %p90 = scmp.ne.s32.totalorder %s81, %s82
      %p91 = scmp.eq.s32.totalorder %s24, 0
      %p92 = por %p90, %p91
      %p93 = scmp.ne.s32.totalorder %s81, %s82
      %p94 = scmp.eq.s32.totalorder %s25, 6
      %p95 = por %p93, %p94
      %p97 = scmp.ne.s32.totalorder %s82, %s96
      %p98 = scmp.eq.s32.totalorder %s25, 0
      %p99 = por %p97, %p98
      %s101 = sadd.s32 %s100, 1
      %p104 = scmp.eq.s32.totalorder %s19, 6
      %p105 = scmp.ne.s32.totalorder %s100, %s102
      %p106 = scmp.eq.s32.totalorder %s19, 0
      %p107 = por %p105, %p106
      %p108 = scmp.ne.s32.totalorder %s100, %s102
      %p109 = scmp.eq.s32.totalorder %s24, 6
      %p110 = por %p108, %p109
      %p111 = scmp.ne.s32.totalorder %s102, %s103
      %p112 = scmp.eq.s32.totalorder %s24, 0
      %p113 = por %p111, %p112
      %p114 = scmp.ne.s32.totalorder %s102, %s103
      %p115 = scmp.eq.s32.totalorder %s25, 6
      %p116 = por %p114, %p115
      %p118 = scmp.ne.s32.totalorder %s103, %s117
      %p119 = scmp.eq.s32.totalorder %s25, 0
      %p120 = por %p118, %p119
      %s122 = sadd.s32 %s121, 1
      %p125 = scmp.eq.s32.totalorder %s19, 6
      %p126 = scmp.ne.s32.totalorder %s121, %s123
      %p127 = scmp.eq.s32.totalorder %s19, 0
      %p128 = por %p126, %p127
      %p129 = scmp.ne.s32.totalorder %s121, %s123
      %p130 = scmp.eq.s32.totalorder %s24, 6
      %p131 = por %p129, %p130
      %p132 = scmp.ne.s32.totalorder %s123, %s124
      %p133 = scmp.eq.s32.totalorder %s24, 0
      %p134 = por %p132, %p133
      %p135 = scmp.ne.s32.totalorder %s123, %s124
      %p136 = scmp.eq.s32.totalorder %s25, 6
      %p137 = por %p135, %p136
      %p139 = scmp.ne.s32.totalorder %s124, %s138
      %p140 = scmp.eq.s32.totalorder %s25, 0
      %p141 = por %p139, %p140
      %s143 = sadd.s32 %s142, 1
      %p146 = scmp.eq.s32.totalorder %s19, 6
      %p147 = scmp.ne.s32.totalorder %s142, %s144
      %p148 = scmp.eq.s32.totalorder %s19, 0
      %p149 = por %p147, %p148
      %p150 = scmp.ne.s32.totalorder %s142, %s144
      %p151 = scmp.eq.s32.totalorder %s24, 6
      %p152 = por %p150, %p151
      %p153 = scmp.ne.s32.totalorder %s144, %s145
      %p154 = scmp.eq.s32.totalorder %s24, 0
      %p155 = por %p153, %p154
      %p156 = scmp.ne.s32.totalorder %s144, %s145
      %p157 = scmp.eq.s32.totalorder %s25, 6
      %p158 = por %p156, %p157
      %p160 = scmp.ne.s32.totalorder %s145, %s159
      %p161 = scmp.eq.s32.totalorder %s25, 0
      %p162 = por %p160, %p161
      %s164 = sadd.s32 %s163, 1
      %p167 = scmp.eq.s32.totalorder %s19, 6
      %p168 = scmp.ne.s32.totalorder %s163, %s165
      %p169 = scmp.eq.s32.totalorder %s19, 0
      %p170 = por %p168, %p169
      %p171 = scmp.ne.s32.totalorder %s163, %s165
      %p172 = scmp.eq.s32.totalorder %s24, 6
      %p173 = por %p171, %p172
      %p174 = scmp.ne.s32.totalorder %s165, %s166
      %p175 = scmp.eq.s32.totalorder %s24, 0
      %p176 = por %p174, %p175
      %p177 = scmp.ne.s32.totalorder %s165, %s166
      %p178 = scmp.eq.s32.totalorder %s25, 6
      %p179 = por %p177, %p178
      %p181 = scmp.ne.s32.totalorder %s166, %s180
      %p182 = scmp.eq.s32.totalorder %s25, 0
      %p183 = por %p181, %p182
      %s185 = sadd.s32 %s184, 1
      %p188 = scmp.eq.s32.totalorder %s19, 6
      %p189 = scmp.ne.s32.totalorder %s184, %s186
      %p190 = scmp.eq.s32.totalorder %s19, 0
      %p191 = por %p189, %p190
      %p192 = scmp.ne.s32.totalorder %s184, %s186
      %p193 = scmp.eq.s32.totalorder %s24, 6
      %p194 = por %p192, %p193
      %p195 = scmp.ne.s32.totalorder %s186, %s187
      %p196 = scmp.eq.s32.totalorder %s24, 0
      %p197 = por %p195, %p196
      %p198 = scmp.ne.s32.totalorder %s186, %s187
      %p199 = scmp.eq.s32.totalorder %s25, 6
      %p200 = por %p198, %p199
      %p202 = scmp.ne.s32.totalorder %s187, %s201
      %p203 = scmp.eq.s32.totalorder %s25, 0
      %p204 = por %p202, %p203
      %s206 = sadd.s32 %s205, 1
      %p209 = scmp.eq.s32.totalorder %s19, 6
      %p210 = scmp.ne.s32.totalorder %s205, %s207
      %p211 = scmp.eq.s32.totalorder %s19, 0
      %p212 = por %p210, %p211
      %p213 = scmp.ne.s32.totalorder %s205, %s207
      %p214 = scmp.eq.s32.totalorder %s24, 6
      %p215 = por %p213, %p214
      %p216 = scmp.ne.s32.totalorder %s207, %s208
      %p217 = scmp.eq.s32.totalorder %s24, 0
      %p218 = por %p216, %p217
      %p219 = scmp.ne.s32.totalorder %s207, %s208
      %p220 = scmp.eq.s32.totalorder %s25, 6
      %p221 = por %p219, %p220
      %p223 = scmp.ne.s32.totalorder %s208, %s222
      %p224 = scmp.eq.s32.totalorder %s25, 0
      %p225 = por %p223, %p224
      %s227 = sadd.s32 %s226, 1
      %p230 = scmp.eq.s32.totalorder %s19, 6
      %p231 = scmp.ne.s32.totalorder %s226, %s228
      %p232 = scmp.eq.s32.totalorder %s19, 0
      %p233 = por %p231, %p232
      %p234 = scmp.ne.s32.totalorder %s226, %s228
      %p235 = scmp.eq.s32.totalorder %s24, 6
      %p236 = por %p234, %p235
      %p237 = scmp.ne.s32.totalorder %s228, %s229
      %p238 = scmp.eq.s32.totalorder %s24, 0
      %p239 = por %p237, %p238
      %p240 = scmp.ne.s32.totalorder %s228, %s229
      %p241 = scmp.eq.s32.totalorder %s25, 6
      %p242 = por %p240, %p241
      %p244 = scmp.ne.s32.totalorder %s229, %s243
      %p245 = scmp.eq.s32.totalorder %s25, 0
      %p246 = por %p244, %p245
      %s248 = sadd.s32 %s247, 1
      %p251 = scmp.eq.s32.totalorder %s19, 6
      %p252 = scmp.ne.s32.totalorder %s247, %s249
      %p253 = scmp.eq.s32.totalorder %s19, 0
      %p254 = por %p252, %p253
      %p255 = scmp.ne.s32.totalorder %s247, %s249
      %p256 = scmp.eq.s32.totalorder %s24, 6
      %p257 = por %p255, %p256
      %p258 = scmp.ne.s32.totalorder %s249, %s250
      %p259 = scmp.eq.s32.totalorder %s24, 0
      %p260 = por %p258, %p259
      %p261 = scmp.ne.s32.totalorder %s249, %s250
      %p262 = scmp.eq.s32.totalorder %s25, 6
      %p263 = por %p261, %p262
      %p265 = scmp.ne.s32.totalorder %s250, %s264
      %p266 = scmp.eq.s32.totalorder %s25, 0
      %p267 = por %p265, %p266
      %s268 = ssub.s32 %s19, %s26
      %p269 = scmp.eq.s32.totalorder %s268, 0
      %s271 = sadd.s32 %s270, 1
      %s272 = scalar_select %p269, %s270, %s271
      %p275 = pneg %p269
      %p276 = scmp.eq.s32.totalorder %s19, 6
      %p277 = por %p275, %p276
      %p278 = scmp.ne.s32.totalorder %s270, %s273
      %p279 = scmp.eq.s32.totalorder %s19, 0
      %p280 = por %p278, %p279
      %p281 = scmp.ne.s32.totalorder %s270, %s273
      %p282 = scmp.eq.s32.totalorder %s24, 6
      %p283 = por %p281, %p282
      %p284 = scmp.ne.s32.totalorder %s273, %s274
      %p285 = scmp.eq.s32.totalorder %s24, 0
      %p286 = por %p284, %p285
      %p287 = scmp.ne.s32.totalorder %s273, %s274
      %p288 = scmp.eq.s32.totalorder %s25, 6
      %p289 = por %p287, %p288
      %p291 = scmp.ne.s32.totalorder %s274, %s290
      %p292 = scmp.eq.s32.totalorder %s25, 0
      %p293 = por %p291, %p292
      %p294 = scmp.le.s32.totalorder 1, %s19
      %p295 = scmp.lt.s32.totalorder %s19, 8
      %p296 = pnand %p294, %p295
      %p297 = pneg %p296
      // Predicated region
      $region9: #{tpu_custom_call.1} parent=5 // pred_check
        _
      $region10: #{tpu_custom_call.1} parent=5 // pred_check_branch
        %299 = sbr.rel (%p296) target = $region12
      $region11: #{tpu_custom_call.1} parent=5 // pred_region
        %s300 = ssub.s32 %s19, 1
        // Predicated region
        $region13: #{tpu_custom_call.1} parent=11 // pred_check
          %p301 = pneg %p92
        $region14: #{tpu_custom_call.1} parent=11 // pred_check_branch
          %303 = sbr.rel (%p301) target = $region16
        $region15: #{tpu_custom_call.1} parent=11 // pred_region
          _
        $region16: #{tpu_custom_call.1} parent=11 // pred_fallthru
          _
        // Predicated region
        $region17: #{tpu_custom_call.1} parent=11 // pred_check
          %p304 = pneg %p113
        $region18: #{tpu_custom_call.1} parent=11 // pred_check_branch
          %306 = sbr.rel (%p304) target = $region20
        $region19: #{tpu_custom_call.1} parent=11 // pred_region
          _
        $region20: #{tpu_custom_call.1} parent=11 // pred_fallthru
          _
        // Predicated region
        $region21: #{tpu_custom_call.1} parent=11 // pred_check
          %p307 = pneg %p134
        $region22: #{tpu_custom_call.1} parent=11 // pred_check_branch
          %309 = sbr.rel (%p307) target = $region24
        $region23: #{tpu_custom_call.1} parent=11 // pred_region
          _
        $region24: #{tpu_custom_call.1} parent=11 // pred_fallthru
          _
        // Predicated region
        $region25: #{tpu_custom_call.1} parent=11 // pred_check
          %p310 = pneg %p155
        $region26: #{tpu_custom_call.1} parent=11 // pred_check_branch
          %312 = sbr.rel (%p310) target = $region28
        $region27: #{tpu_custom_call.1} parent=11 // pred_region
          _
        $region28: #{tpu_custom_call.1} parent=11 // pred_fallthru
          _
        // Predicated region
        $region29: #{tpu_custom_call.1} parent=11 // pred_check
          %p313 = pneg %p176
        $region30: #{tpu_custom_call.1} parent=11 // pred_check_branch
          %315 = sbr.rel (%p313) target = $region32
        $region31: #{tpu_custom_call.1} parent=11 // pred_region
          _
        $region32: #{tpu_custom_call.1} parent=11 // pred_fallthru
          _
        // Predicated region
        $region33: #{tpu_custom_call.1} parent=11 // pred_check
          %p316 = pneg %p197
        $region34: #{tpu_custom_call.1} parent=11 // pred_check_branch
          %318 = sbr.rel (%p316) target = $region36
        $region35: #{tpu_custom_call.1} parent=11 // pred_region
          _
        $region36: #{tpu_custom_call.1} parent=11 // pred_fallthru
          _
        // Predicated region
        $region37: #{tpu_custom_call.1} parent=11 // pred_check
          %p319 = pneg %p218
        $region38: #{tpu_custom_call.1} parent=11 // pred_check_branch
          %321 = sbr.rel (%p319) target = $region40
        $region39: #{tpu_custom_call.1} parent=11 // pred_region
          _
        $region40: #{tpu_custom_call.1} parent=11 // pred_fallthru
          _
        // Predicated region
        $region41: #{tpu_custom_call.1} parent=11 // pred_check
          %p322 = pneg %p239
        $region42: #{tpu_custom_call.1} parent=11 // pred_check_branch
          %324 = sbr.rel (%p322) target = $region44
        $region43: #{tpu_custom_call.1} parent=11 // pred_region
          _
        $region44: #{tpu_custom_call.1} parent=11 // pred_fallthru
          _
        // Predicated region
        $region45: #{tpu_custom_call.1} parent=11 // pred_check
          %p325 = pneg %p260
        $region46: #{tpu_custom_call.1} parent=11 // pred_check_branch
          %327 = sbr.rel (%p325) target = $region48
        $region47: #{tpu_custom_call.1} parent=11 // pred_region
          _
        $region48: #{tpu_custom_call.1} parent=11 // pred_fallthru
          _
      $region12: #{tpu_custom_call.1} parent=5 // pred_fallthru
        _
      %p328 = scmp.lt.s32.totalorder %s19, 7
      // Predicated region
      $region49: #{tpu_custom_call.1} parent=5 // pred_check
        %p329 = pneg %p328
      $region50: #{tpu_custom_call.1} parent=5 // pred_check_branch
        %331 = sbr.rel (%p329) target = $region52
      $region51: #{tpu_custom_call.1} parent=5 // pred_region
        // Predicated region
        $region53: #{tpu_custom_call.1} parent=51 // pred_check
          %p332 = pneg %p39
        $region54: #{tpu_custom_call.1} parent=51 // pred_check_branch
          %334 = sbr.rel (%p332) target = $region56
        $region55: #{tpu_custom_call.1} parent=51 // pred_region
          %s335 = smul.u32 4, %s19
          %s336 = ssub.s32 25, %s335
          %p337 = scmp.lt.s32.totalorder %s336, 4
          %s338 = scalar_select %p337, %s336, 4
          %s339 = smul.u32 128, %s338
          %p340 = scmp.lt.s32.totalorder %s335, 24
          %s341 = scalar_select %p340, %s335, 24
          %s342 = smul.addr %s341, 8
          %s343 = scalar_lea.vmem %s0, %s342
          %s344 = smul.u32 4, %s19
          %s345 = ssub.s32 25, %s344
          %p346 = scmp.lt.s32.totalorder %s345, 4
          %s347 = scalar_select %p346, %s345, 4
          %s348 = smul.u32 128, %s347
        $region56: #{tpu_custom_call.1} parent=51 // pred_fallthru
          _
        // Predicated region
        $region57: #{tpu_custom_call.1} parent=51 // pred_check
          %p349 = pneg %p65
        $region58: #{tpu_custom_call.1} parent=51 // pred_check_branch
          %351 = sbr.rel (%p349) target = $region60
        $region59: #{tpu_custom_call.1} parent=51 // pred_region
          %s352 = smul.u32 4, %s19
          %s353 = ssub.s32 25, %s352
          %p354 = scmp.lt.s32.totalorder %s353, 4
          %s355 = scalar_select %p354, %s353, 4
          %s356 = smul.u32 128, %s355
          %p357 = scmp.lt.s32.totalorder %s352, 24
          %s358 = scalar_select %p357, %s352, 24
          %s359 = smul.addr %s358, 8
          %s360 = scalar_lea.vmem %s1, %s359
          %s361 = smul.u32 4, %s19
          %s362 = ssub.s32 25, %s361
          %p363 = scmp.lt.s32.totalorder %s362, 4
          %s364 = scalar_select %p363, %s362, 4
          %s365 = smul.u32 128, %s364
        $region60: #{tpu_custom_call.1} parent=51 // pred_fallthru
          _
      $region52: #{tpu_custom_call.1} parent=5 // pred_fallthru
        _
      %p366 = scmp.le.s32.totalorder 1, %s19
      %p367 = scmp.lt.s32.totalorder %s19, 8
      %p368 = pnand %p366, %p367
      %p369 = pneg %p368
      // Predicated region
      $region61: #{tpu_custom_call.1} parent=5 // pred_check
        _
      $region62: #{tpu_custom_call.1} parent=5 // pred_check_branch
        %371 = sbr.rel (%p368) target = $region64
      $region63: #{tpu_custom_call.1} parent=5 // pred_region
        %s372 = ssub.s32 %s19, 1
        %s373 = smul.u32 4, %s24
        %s374 = ssub.s32 25, %s373
        %p375 = scmp.lt.s32.totalorder %s374, 4
        %s376 = scalar_select %p375, %s374, 4
        %s377 = smul.u32 128, %s376
        %p378 = scmp.lt.s32.totalorder %s373, 24
        %s379 = scalar_select %p378, %s373, 24
        %s380 = smul.addr %s379, 8
        %s381 = scalar_lea.vmem %s0, %s380
        %p382 = pneg %p45
        %p383 = pneg %p42
        %s384 = smul.u32 4, %s24
        %s385 = ssub.s32 25, %s384
        %p386 = scmp.lt.s32.totalorder %s385, 4
        %s387 = scalar_select %p386, %s385, 4
        %s388 = smul.u32 128, %s387
        %p389 = scmp.lt.s32.totalorder %s384, 24
        %s390 = scalar_select %p389, %s384, 24
        %s391 = smul.addr %s390, 8
        %s392 = scalar_lea.vmem %s1, %s391
        %p393 = pneg %p71
        %p394 = pneg %p68
        %p395 = pneg %p92
        %p396 = pneg %p89
        %p397 = pneg %p113
        %p398 = pneg %p110
        %p399 = pneg %p134
        %p400 = pneg %p131
        %p401 = pneg %p155
        %p402 = pneg %p152
        %p403 = pneg %p176
        %p404 = pneg %p173
        %p405 = pneg %p197
        %p406 = pneg %p194
        %p407 = pneg %p218
        %p408 = pneg %p215
        %p409 = pneg %p239
        %p410 = pneg %p236
        %p411 = pneg %p260
        %p412 = pneg %p257
        %p413 = pneg %p286
        %p414 = pneg %p283
        %s415 = sand.u32 %s273, 1
        %s416 = sand.u32 %s273, 1
        %s417 = smul.addr %s416, 32
        %s418 = scalar_lea.vmem [#allocation3], %s417
        %s419 = smul.u32 4, %s24
        %s420 = ssub.s32 25, %s419
        %p421 = scmp.lt.s32.totalorder %s420, 4
        %s422 = scalar_select %p421, %s420, 4
        %s423 = smul.u32 128, %s422
        %p424 = scmp.lt.s32.totalorder %s419, 24
        %s425 = scalar_select %p424, %s419, 24
        %s426 = smul.addr %s425, 8
        %s427 = scalar_lea.vmem %s0, %s426
        %s428 = smul.u32 4, %s24
        %s429 = ssub.s32 25, %s428
        %p430 = scmp.lt.s32.totalorder %s429, 4
        %s431 = scalar_select %p430, %s429, 4
        %s432 = smul.u32 128, %s431
        %s433 = smul.u32 4, %s24
        %s434 = ssub.s32 25, %s433
        %p435 = scmp.lt.s32.totalorder %s434, 4
        %s436 = scalar_select %p435, %s434, 4
        %s437 = smul.u32 128, %s436
        %p438 = scmp.lt.s32.totalorder %s433, 24
        %s439 = scalar_select %p438, %s433, 24
        %s440 = smul.addr %s439, 8
        %s441 = scalar_lea.vmem %s1, %s440
        %s442 = smul.u32 4, %s24
        %s443 = ssub.s32 25, %s442
        %p444 = scmp.lt.s32.totalorder %s443, 4
        %s445 = scalar_select %p444, %s443, 4
        %s446 = smul.u32 128, %s445
        %s447 = smul.u32 4, %s24
        %s448 = ssub.s32 25, %s447
        %p449 = scmp.lt.s32.totalorder %s448, 4
        %s450 = scalar_select %p449, %s448, 4
        %s451 = smul.u32 128, %s450
        %v452 = vld [vmem:[%s427] sm:$0xff]
        %v453 = vld [vmem:[%s427 + $0x8] sm:$0xff]
        %v454 = vld [vmem:[%s427 + $0x10] sm:$0xff]
        %v455 = vld [vmem:[%s427 + $0x18] sm:$0xff]
        %v456 = vld [vmem:[%s2] sm:$0xff]
        %v457 = vld [vmem:[%s2 + $0x8] sm:$0xff]
        %v458 = vld [vmem:[%s2 + $0x10] sm:$0xff]
        %v459 = vld [vmem:[%s2 + $0x18] sm:$0xff]
        %v460 = vld [vmem:[%s3] sm:$0x1]
        %v462 = vlaneseq
        %v463 = vshrl.u32 %v462, 7
        %v464 = vsub.s32 0, %v463
        %v465 = vrot.slane %v460, %v464
        %vm467 = vcmask 261120
        %v469 = vsel %vm467, %v452, 0
        %v472 = vsel %vm467, %v453, 0
        %v475 = vsel %vm467, %v454, 0
        %v478 = vsel %vm467, %v455, 0
        %480 = vmatprep.subr.mxu0 0.0
        %481 = vmatpush1.msra.mxu0 %v456
        %482 = vmatprep.subr.mxu0 0.0
        %483 = vmatpush1.msra.mxu0 %v457
        %484 = vmatprep.subr.mxu0 0.0
        %485 = vmatpush1.msra.mxu0 %v458
        %486 = vmatprep.subr.mxu0 0.0
        %487 = vmatpush1.msra.mxu0 %v459
        %488 = vmatprep.subr.mxu0 0.0
        %489 = vmatpush1.msra.mxu0 0.0
        %490 = vmatprep.subr.mxu0 0.0
        %491 = vmatpush1.msra.mxu0 0.0
        %492 = vmatprep.subr.mxu0 0.0
        %493 = vmatpush1.msra.mxu0 0.0
        %494 = vmatprep.subr.mxu0 0.0
        %495 = vmatpush1.msra.mxu0 0.0
        %496 = vmatprep.subr.mxu0 0.0
        %497 = vmatpush1.msra.mxu0 0.0
        %498 = vmatprep.subr.mxu0 0.0
        %499 = vmatpush1.msra.mxu0 0.0
        %500 = vmatprep.subr.mxu0 0.0
        %501 = vmatpush1.msra.mxu0 0.0
        %502 = vmatprep.subr.mxu0 0.0
        %503 = vmatpush1.msra.mxu0 0.0
        %504 = vmatprep.subr.mxu0 0.0
        %505 = vmatpush1.msra.mxu0 0.0
        %506 = vmatprep.subr.mxu0 0.0
        %507 = vmatpush1.msra.mxu0 0.0
        %508 = vmatprep.subr.mxu0 0.0
        %509 = vmatpush1.msra.mxu0 0.0
        %510 = vmatprep.subr.mxu0 0.0
        %511 = vmatpush1.msra.mxu0 0.0
        %512 = vmatprep.subr.mxu0 0.0
        %513 = vmatpush1.msra.mxu0 0.0
        %514 = vmatprep.subr.mxu0 0.0
        %515 = vmatpush1.msra.mxu0 0.0
        %516 = vmatprep.subr.mxu0 0.0
        %517 = vmatpush1.msra.mxu0 0.0
        %518 = vmatprep.subr.mxu0 0.0
        %519 = vmatpush1.msra.mxu0 0.0
        %520 = vmatprep.subr.mxu0 0.0
        %521 = vmatpush1.msra.mxu0 0.0
        %522 = vmatprep.subr.mxu0 0.0
        %523 = vmatpush1.msra.mxu0 0.0
        %524 = vmatprep.subr.mxu0 0.0
        %525 = vmatpush1.msra.mxu0 0.0
        %526 = vmatprep.subr.mxu0 0.0
        %527 = vmatpush1.msra.mxu0 0.0
        %528 = vmatprep.subr.mxu0 0.0
        %529 = vmatpush1.msra.mxu0 0.0
        %530 = vmatprep.subr.mxu0 0.0
        %531 = vmatpush1.msra.mxu0 0.0
        %532 = vmatprep.subr.mxu0 0.0
        %533 = vmatpush1.msra.mxu0 0.0
        %534 = vmatprep.subr.mxu0 0.0
        %535 = vmatpush1.msra.mxu0 0.0
        %536 = vmatprep.subr.mxu0 0.0
        %537 = vmatpush1.msra.mxu0 0.0
        %538 = vmatprep.subr.mxu0 0.0
        %539 = vmatpush1.msra.mxu0 0.0
        %540 = vmatprep.subr.mxu0 0.0
        %541 = vmatpush1.msra.mxu0 0.0
        %542 = vmatprep.subr.mxu0 0.0
        %543 = vmatpush1.msra.mxu0 0.0
        %544 = vmatprep.mubr.f32.mxu0 0.0
        %545 = vmatmul.mubr.f32.gmra.mrb[0].mxu0 %v469
        %v546 = vpop.f32.mrb[0].mxu0
        %v547 = vadd.f32 %v465, %v546
        %v548 = vpop.f32.mrb[0].mxu0
        %549 = vmatprep.mubr.f32.mxu0 0.0
        %550 = vmatmul.mubr.f32.gmra.mrb[0].mxu0 %v472
        %v551 = vpop.f32.mrb[0].mxu0
        %v552 = vadd.f32 %v465, %v551
        %v553 = vpop.f32.mrb[0].mxu0
        %554 = vmatprep.mubr.f32.mxu0 0.0
        %555 = vmatmul.mubr.f32.gmra.mrb[0].mxu0 %v475
        %v556 = vpop.f32.mrb[0].mxu0
        %v557 = vadd.f32 %v465, %v556
        %v558 = vpop.f32.mrb[0].mxu0
        %559 = vmatprep.mubr.f32.mxu0 0.0
        %560 = vmatmul.mubr.f32.gmra.mrb[0].mxu0 %v478
        %v561 = vpop.f32.mrb[0].mxu0
        %v562 = vadd.f32 %v465, %v561
        %v563 = vpop.f32.mrb[0].mxu0
        %564 = vdwg.mxu0
        %v565 = vmax.f32 %v547, 0.0
        %v566 = vmax.f32 %v552, 0.0
        %v567 = vmax.f32 %v557, 0.0
        %v568 = vmax.f32 %v562, 0.0
        %v569 = vld [vmem:[%s441] sm:$0xff]
        %v570 = vld [vmem:[%s441 + $0x8] sm:$0xff]
        %v571 = vld [vmem:[%s441 + $0x10] sm:$0xff]
        %v572 = vld [vmem:[%s441 + $0x18] sm:$0xff]
        %v573 = vld [vmem:[%s4] sm:$0xff]
        %v574 = vld [vmem:[%s4 + $0x8] sm:$0xff]
        %v575 = vld [vmem:[%s4 + $0x10] sm:$0xff]
        %v576 = vld [vmem:[%s4 + $0x18] sm:$0xff]
        %v577 = vld [vmem:[%s5] sm:$0x1]
        %v579 = vlaneseq
        %v580 = vshrl.u32 %v579, 7
        %v581 = vsub.s32 0, %v580
        %v582 = vrot.slane %v577, %v581
        %v585 = vsel %vm467, %v569, 0
        %v588 = vsel %vm467, %v570, 0
        %v591 = vsel %vm467, %v571, 0
        %v594 = vsel %vm467, %v572, 0
        %596 = vmatprep.subr.mxu0 0.0
        %597 = vmatpush1.msra.mxu0 %v573
        %598 = vmatprep.subr.mxu0 0.0
        %599 = vmatpush1.msra.mxu0 %v574
        %600 = vmatprep.subr.mxu0 0.0
        %601 = vmatpush1.msra.mxu0 %v575
        %602 = vmatprep.subr.mxu0 0.0
        %603 = vmatpush1.msra.mxu0 %v576
        %604 = vmatprep.subr.mxu0 0.0
        %605 = vmatpush1.msra.mxu0 0.0
        %606 = vmatprep.subr.mxu0 0.0
        %607 = vmatpush1.msra.mxu0 0.0
        %608 = vmatprep.subr.mxu0 0.0
        %609 = vmatpush1.msra.mxu0 0.0
        %610 = vmatprep.subr.mxu0 0.0
        %611 = vmatpush1.msra.mxu0 0.0
        %612 = vmatprep.subr.mxu0 0.0
        %613 = vmatpush1.msra.mxu0 0.0
        %614 = vmatprep.subr.mxu0 0.0
        %615 = vmatpush1.msra.mxu0 0.0
        %616 = vmatprep.subr.mxu0 0.0
        %617 = vmatpush1.msra.mxu0 0.0
        %618 = vmatprep.subr.mxu0 0.0
        %619 = vmatpush1.msra.mxu0 0.0
        %620 = vmatprep.subr.mxu0 0.0
        %621 = vmatpush1.msra.mxu0 0.0
        %622 = vmatprep.subr.mxu0 0.0
        %623 = vmatpush1.msra.mxu0 0.0
        %624 = vmatprep.subr.mxu0 0.0
        %625 = vmatpush1.msra.mxu0 0.0
        %626 = vmatprep.subr.mxu0 0.0
        %627 = vmatpush1.msra.mxu0 0.0
        %628 = vmatprep.subr.mxu0 0.0
        %629 = vmatpush1.msra.mxu0 0.0
        %630 = vmatprep.subr.mxu0 0.0
        %631 = vmatpush1.msra.mxu0 0.0
        %632 = vmatprep.subr.mxu0 0.0
        %633 = vmatpush1.msra.mxu0 0.0
        %634 = vmatprep.subr.mxu0 0.0
        %635 = vmatpush1.msra.mxu0 0.0
        %636 = vmatprep.subr.mxu0 0.0
        %637 = vmatpush1.msra.mxu0 0.0
        %638 = vmatprep.subr.mxu0 0.0
        %639 = vmatpush1.msra.mxu0 0.0
        %640 = vmatprep.subr.mxu0 0.0
        %641 = vmatpush1.msra.mxu0 0.0
        %642 = vmatprep.subr.mxu0 0.0
        %643 = vmatpush1.msra.mxu0 0.0
        %644 = vmatprep.subr.mxu0 0.0
        %645 = vmatpush1.msra.mxu0 0.0
        %646 = vmatprep.subr.mxu0 0.0
        %647 = vmatpush1.msra.mxu0 0.0
        %648 = vmatprep.subr.mxu0 0.0
        %649 = vmatpush1.msra.mxu0 0.0
        %650 = vmatprep.subr.mxu0 0.0
        %651 = vmatpush1.msra.mxu0 0.0
        %652 = vmatprep.subr.mxu0 0.0
        %653 = vmatpush1.msra.mxu0 0.0
        %654 = vmatprep.subr.mxu0 0.0
        %655 = vmatpush1.msra.mxu0 0.0
        %656 = vmatprep.subr.mxu0 0.0
        %657 = vmatpush1.msra.mxu0 0.0
        %658 = vmatprep.subr.mxu0 0.0
        %659 = vmatpush1.msra.mxu0 0.0
        %660 = vmatprep.mubr.f32.mxu0 0.0
        %661 = vmatmul.mubr.f32.gmra.mrb[0].mxu0 %v585
        %v662 = vpop.f32.mrb[0].mxu0
        %v663 = vadd.f32 %v582, %v662
        %v664 = vpop.f32.mrb[0].mxu0
        %665 = vmatprep.mubr.f32.mxu0 0.0
        %666 = vmatmul.mubr.f32.gmra.mrb[0].mxu0 %v588
        %v667 = vpop.f32.mrb[0].mxu0
        %v668 = vadd.f32 %v582, %v667
        %v669 = vpop.f32.mrb[0].mxu0
        %670 = vmatprep.mubr.f32.mxu0 0.0
        %671 = vmatmul.mubr.f32.gmra.mrb[0].mxu0 %v591
        %v672 = vpop.f32.mrb[0].mxu0
        %v673 = vadd.f32 %v582, %v672
        %v674 = vpop.f32.mrb[0].mxu0
        %675 = vmatprep.mubr.f32.mxu0 0.0
        %676 = vmatmul.mubr.f32.gmra.mrb[0].mxu0 %v594
        %v677 = vpop.f32.mrb[0].mxu0
        %v678 = vadd.f32 %v582, %v677
        %v679 = vpop.f32.mrb[0].mxu0
        %680 = vdwg.mxu0
        %v681 = vmax.f32 %v663, 0.0
        %v682 = vmax.f32 %v668, 0.0
        %v683 = vmax.f32 %v673, 0.0
        %v684 = vmax.f32 %v678, 0.0
        %v685 = vld [vmem:[%s6] sm:$0xff]
        %v686 = vld [vmem:[%s6 + $0x8] sm:$0xff]
        %v687 = vld [vmem:[%s6 + $0x10] sm:$0xff]
        %v688 = vld [vmem:[%s6 + $0x18] sm:$0xff]
        %v689 = vld [vmem:[%s7] sm:$0xff]
        %v690 = vld [vmem:[%s7 + $0x8] sm:$0xff]
        %v691 = vld [vmem:[%s7 + $0x10] sm:$0xff]
        %v692 = vld [vmem:[%s7 + $0x18] sm:$0xff]
        %v694 = vsel %vm467, %v681, 0
        %v697 = vsel %vm467, %v682, 0
        %v700 = vsel %vm467, %v683, 0
        %v703 = vsel %vm467, %v684, 0
        %705 = vmatprep.subr.mxu0 0.0
        %706 = vmatpush1.msra.mxu0 %v689
        %707 = vmatprep.subr.mxu0 0.0
        %708 = vmatpush1.msra.mxu0 %v690
        %709 = vmatprep.subr.mxu0 0.0
        %710 = vmatpush1.msra.mxu0 %v691
        %711 = vmatprep.subr.mxu0 0.0
        %712 = vmatpush1.msra.mxu0 %v692
        %713 = vmatprep.subr.mxu0 0.0
        %714 = vmatpush1.msra.mxu0 0.0
        %715 = vmatprep.subr.mxu0 0.0
        %716 = vmatpush1.msra.mxu0 0.0
        %717 = vmatprep.subr.mxu0 0.0
        %718 = vmatpush1.msra.mxu0 0.0
        %719 = vmatprep.subr.mxu0 0.0
        %720 = vmatpush1.msra.mxu0 0.0
        %721 = vmatprep.subr.mxu0 0.0
        %722 = vmatpush1.msra.mxu0 0.0
        %723 = vmatprep.subr.mxu0 0.0
        %724 = vmatpush1.msra.mxu0 0.0
        %725 = vmatprep.subr.mxu0 0.0
        %726 = vmatpush1.msra.mxu0 0.0
        %727 = vmatprep.subr.mxu0 0.0
        %728 = vmatpush1.msra.mxu0 0.0
        %729 = vmatprep.subr.mxu0 0.0
        %730 = vmatpush1.msra.mxu0 0.0
        %731 = vmatprep.subr.mxu0 0.0
        %732 = vmatpush1.msra.mxu0 0.0
        %733 = vmatprep.subr.mxu0 0.0
        %734 = vmatpush1.msra.mxu0 0.0
        %735 = vmatprep.subr.mxu0 0.0
        %736 = vmatpush1.msra.mxu0 0.0
        %737 = vmatprep.subr.mxu0 0.0
        %738 = vmatpush1.msra.mxu0 0.0
        %739 = vmatprep.subr.mxu0 0.0
        %740 = vmatpush1.msra.mxu0 0.0
        %741 = vmatprep.subr.mxu0 0.0
        %742 = vmatpush1.msra.mxu0 0.0
        %743 = vmatprep.subr.mxu0 0.0
        %744 = vmatpush1.msra.mxu0 0.0
        %745 = vmatprep.subr.mxu0 0.0
        %746 = vmatpush1.msra.mxu0 0.0
        %747 = vmatprep.subr.mxu0 0.0
        %748 = vmatpush1.msra.mxu0 0.0
        %749 = vmatprep.subr.mxu0 0.0
        %750 = vmatpush1.msra.mxu0 0.0
        %751 = vmatprep.subr.mxu0 0.0
        %752 = vmatpush1.msra.mxu0 0.0
        %753 = vmatprep.subr.mxu0 0.0
        %754 = vmatpush1.msra.mxu0 0.0
        %755 = vmatprep.subr.mxu0 0.0
        %756 = vmatpush1.msra.mxu0 0.0
        %757 = vmatprep.subr.mxu0 0.0
        %758 = vmatpush1.msra.mxu0 0.0
        %759 = vmatprep.subr.mxu0 0.0
        %760 = vmatpush1.msra.mxu0 0.0
        %761 = vmatprep.subr.mxu0 0.0
        %762 = vmatpush1.msra.mxu0 0.0
        %763 = vmatprep.subr.mxu0 0.0
        %764 = vmatpush1.msra.mxu0 0.0
        %765 = vmatprep.subr.mxu0 0.0
        %766 = vmatpush1.msra.mxu0 0.0
        %767 = vmatprep.subr.mxu0 0.0
        %768 = vmatpush1.msra.mxu0 0.0
        %769 = vmatprep.mubr.f32.mxu0 0.0
        %770 = vmatmul.mubr.f32.gmra.mrb[0].mxu0 %v694
        %v771 = vpop.f32.mrb[0].mxu0
        %v772 = vadd.f32 0.0, %v771
        %v773 = vpop.f32.mrb[0].mxu0
        %774 = vmatprep.mubr.f32.mxu0 0.0
        %775 = vmatmul.mubr.f32.gmra.mrb[0].mxu0 %v697
        %v776 = vpop.f32.mrb[0].mxu0
        %v777 = vadd.f32 0.0, %v776
        %v778 = vpop.f32.mrb[0].mxu0
        %779 = vmatprep.mubr.f32.mxu0 0.0
        %780 = vmatmul.mubr.f32.gmra.mrb[0].mxu0 %v700
        %v781 = vpop.f32.mrb[0].mxu0
        %v782 = vadd.f32 0.0, %v781
        %v783 = vpop.f32.mrb[0].mxu0
        %784 = vmatprep.mubr.f32.mxu0 0.0
        %785 = vmatmul.mubr.f32.gmra.mrb[0].mxu0 %v703
        %v786 = vpop.f32.mrb[0].mxu0
        %v787 = vadd.f32 0.0, %v786
        %v788 = vpop.f32.mrb[0].mxu0
        %789 = vdwg.mxu0
        %v791 = vsel %vm467, %v565, 0
        %v794 = vsel %vm467, %v566, 0
        %v797 = vsel %vm467, %v567, 0
        %v800 = vsel %vm467, %v568, 0
        %802 = vmatprep.subr.mxu0 0.0
        %803 = vmatpush1.msra.mxu0 %v685
        %804 = vmatprep.subr.mxu0 0.0
        %805 = vmatpush1.msra.mxu0 %v686
        %806 = vmatprep.subr.mxu0 0.0
        %807 = vmatpush1.msra.mxu0 %v687
        %808 = vmatprep.subr.mxu0 0.0
        %809 = vmatpush1.msra.mxu0 %v688
        %810 = vmatprep.subr.mxu0 0.0
        %811 = vmatpush1.msra.mxu0 0.0
        %812 = vmatprep.subr.mxu0 0.0
        %813 = vmatpush1.msra.mxu0 0.0
        %814 = vmatprep.subr.mxu0 0.0
        %815 = vmatpush1.msra.mxu0 0.0
        %816 = vmatprep.subr.mxu0 0.0
        %817 = vmatpush1.msra.mxu0 0.0
        %818 = vmatprep.subr.mxu0 0.0
        %819 = vmatpush1.msra.mxu0 0.0
        %820 = vmatprep.subr.mxu0 0.0
        %821 = vmatpush1.msra.mxu0 0.0
        %822 = vmatprep.subr.mxu0 0.0
        %823 = vmatpush1.msra.mxu0 0.0
        %824 = vmatprep.subr.mxu0 0.0
        %825 = vmatpush1.msra.mxu0 0.0
        %826 = vmatprep.subr.mxu0 0.0
        %827 = vmatpush1.msra.mxu0 0.0
        %828 = vmatprep.subr.mxu0 0.0
        %829 = vmatpush1.msra.mxu0 0.0
        %830 = vmatprep.subr.mxu0 0.0
        %831 = vmatpush1.msra.mxu0 0.0
        %832 = vmatprep.subr.mxu0 0.0
        %833 = vmatpush1.msra.mxu0 0.0
        %834 = vmatprep.subr.mxu0 0.0
        %835 = vmatpush1.msra.mxu0 0.0
        %836 = vmatprep.subr.mxu0 0.0
        %837 = vmatpush1.msra.mxu0 0.0
        %838 = vmatprep.subr.mxu0 0.0
        %839 = vmatpush1.msra.mxu0 0.0
        %840 = vmatprep.subr.mxu0 0.0
        %841 = vmatpush1.msra.mxu0 0.0
        %842 = vmatprep.subr.mxu0 0.0
        %843 = vmatpush1.msra.mxu0 0.0
        %844 = vmatprep.subr.mxu0 0.0
        %845 = vmatpush1.msra.mxu0 0.0
        %846 = vmatprep.subr.mxu0 0.0
        %847 = vmatpush1.msra.mxu0 0.0
        %848 = vmatprep.subr.mxu0 0.0
        %849 = vmatpush1.msra.mxu0 0.0
        %850 = vmatprep.subr.mxu0 0.0
        %851 = vmatpush1.msra.mxu0 0.0
        %852 = vmatprep.subr.mxu0 0.0
        %853 = vmatpush1.msra.mxu0 0.0
        %854 = vmatprep.subr.mxu0 0.0
        %855 = vmatpush1.msra.mxu0 0.0
        %856 = vmatprep.subr.mxu0 0.0
        %857 = vmatpush1.msra.mxu0 0.0
        %858 = vmatprep.subr.mxu0 0.0
        %859 = vmatpush1.msra.mxu0 0.0
        %860 = vmatprep.subr.mxu0 0.0
        %861 = vmatpush1.msra.mxu0 0.0
        %862 = vmatprep.subr.mxu0 0.0
        %863 = vmatpush1.msra.mxu0 0.0
        %864 = vmatprep.subr.mxu0 0.0
        %865 = vmatpush1.msra.mxu0 0.0
        %866 = vmatprep.mubr.f32.mxu0 0.0
        %867 = vmatmul.mubr.f32.gmra.mrb[0].mxu0 %v791
        %v868 = vpop.f32.mrb[0].mxu0
        %v869 = vadd.f32 %v772, %v868
        %v870 = vpop.f32.mrb[0].mxu0
        %871 = vmatprep.mubr.f32.mxu0 0.0
        %872 = vmatmul.mubr.f32.gmra.mrb[0].mxu0 %v794
        %v873 = vpop.f32.mrb[0].mxu0
        %v874 = vadd.f32 %v777, %v873
        %v875 = vpop.f32.mrb[0].mxu0
        %876 = vmatprep.mubr.f32.mxu0 0.0
        %877 = vmatmul.mubr.f32.gmra.mrb[0].mxu0 %v797
        %v878 = vpop.f32.mrb[0].mxu0
        %v879 = vadd.f32 %v782, %v878
        %v880 = vpop.f32.mrb[0].mxu0
        %881 = vmatprep.mubr.f32.mxu0 0.0
        %882 = vmatmul.mubr.f32.gmra.mrb[0].mxu0 %v800
        %v883 = vpop.f32.mrb[0].mxu0
        %v884 = vadd.f32 %v787, %v883
        %v885 = vpop.f32.mrb[0].mxu0
        %886 = vdwg.mxu0
        %v887 = vld [vmem:[%s8] sm:$0x1]
        %v889 = vlaneseq
        %v890 = vshrl.u32 %v889, 7
        %v891 = vsub.s32 0, %v890
        %v892 = vrot.slane %v887, %v891
        %v894 = vadd.f32 %v869, %v892
        %v895 = vadd.f32 %v874, %v892
        %v896 = vadd.f32 %v879, %v892
        %v897 = vadd.f32 %v884, %v892
        %v898 = vmax.f32 %v894, 0.0
        %v899 = vmax.f32 %v895, 0.0
        %v900 = vmax.f32 %v896, 0.0
        %v901 = vmax.f32 %v897, 0.0
        %v902 = vld [vmem:[%s9] sm:$0xff]
        %v903 = vld [vmem:[%s9 + $0x8] sm:$0xff]
        %v904 = vld [vmem:[%s9 + $0x10] sm:$0xff]
        %v905 = vld [vmem:[%s9 + $0x18] sm:$0xff]
        %v906 = vld [vmem:[#allocation2] sm:$0x1]
        %v908 = vlaneseq
        %v909 = vshrl.u32 %v908, 7
        %v910 = vsub.s32 0, %v909
        %v911 = vrot.slane %v906, %v910
        %v914 = vsel %vm467, %v898, 0
        %v917 = vsel %vm467, %v899, 0
        %v920 = vsel %vm467, %v900, 0
        %v923 = vsel %vm467, %v901, 0
        %925 = vmatprep.subr.mxu0 0.0
        %926 = vmatpush1.msra.mxu0 %v902
        %927 = vmatprep.subr.mxu0 0.0
        %928 = vmatpush1.msra.mxu0 %v903
        %929 = vmatprep.subr.mxu0 0.0
        %930 = vmatpush1.msra.mxu0 %v904
        %931 = vmatprep.subr.mxu0 0.0
        %932 = vmatpush1.msra.mxu0 %v905
        %933 = vmatprep.subr.mxu0 0.0
        %934 = vmatpush1.msra.mxu0 0.0
        %935 = vmatprep.subr.mxu0 0.0
        %936 = vmatpush1.msra.mxu0 0.0
        %937 = vmatprep.subr.mxu0 0.0
        %938 = vmatpush1.msra.mxu0 0.0
        %939 = vmatprep.subr.mxu0 0.0
        %940 = vmatpush1.msra.mxu0 0.0
        %941 = vmatprep.subr.mxu0 0.0
        %942 = vmatpush1.msra.mxu0 0.0
        %943 = vmatprep.subr.mxu0 0.0
        %944 = vmatpush1.msra.mxu0 0.0
        %945 = vmatprep.subr.mxu0 0.0
        %946 = vmatpush1.msra.mxu0 0.0
        %947 = vmatprep.subr.mxu0 0.0
        %948 = vmatpush1.msra.mxu0 0.0
        %949 = vmatprep.subr.mxu0 0.0
        %950 = vmatpush1.msra.mxu0 0.0
        %951 = vmatprep.subr.mxu0 0.0
        %952 = vmatpush1.msra.mxu0 0.0
        %953 = vmatprep.subr.mxu0 0.0
        %954 = vmatpush1.msra.mxu0 0.0
        %955 = vmatprep.subr.mxu0 0.0
        %956 = vmatpush1.msra.mxu0 0.0
        %957 = vmatprep.subr.mxu0 0.0
        %958 = vmatpush1.msra.mxu0 0.0
        %959 = vmatprep.subr.mxu0 0.0
        %960 = vmatpush1.msra.mxu0 0.0
        %961 = vmatprep.subr.mxu0 0.0
        %962 = vmatpush1.msra.mxu0 0.0
        %963 = vmatprep.subr.mxu0 0.0
        %964 = vmatpush1.msra.mxu0 0.0
        %965 = vmatprep.subr.mxu0 0.0
        %966 = vmatpush1.msra.mxu0 0.0
        %967 = vmatprep.subr.mxu0 0.0
        %968 = vmatpush1.msra.mxu0 0.0
        %969 = vmatprep.subr.mxu0 0.0
        %970 = vmatpush1.msra.mxu0 0.0
        %971 = vmatprep.subr.mxu0 0.0
        %972 = vmatpush1.msra.mxu0 0.0
        %973 = vmatprep.subr.mxu0 0.0
        %974 = vmatpush1.msra.mxu0 0.0
        %975 = vmatprep.subr.mxu0 0.0
        %976 = vmatpush1.msra.mxu0 0.0
        %977 = vmatprep.subr.mxu0 0.0
        %978 = vmatpush1.msra.mxu0 0.0
        %979 = vmatprep.subr.mxu0 0.0
        %980 = vmatpush1.msra.mxu0 0.0
        %981 = vmatprep.subr.mxu0 0.0
        %982 = vmatpush1.msra.mxu0 0.0
        %983 = vmatprep.subr.mxu0 0.0
        %984 = vmatpush1.msra.mxu0 0.0
        %985 = vmatprep.subr.mxu0 0.0
        %986 = vmatpush1.msra.mxu0 0.0
        %987 = vmatprep.subr.mxu0 0.0
        %988 = vmatpush1.msra.mxu0 0.0
        %989 = vmatprep.mubr.f32.mxu0 0.0
        %990 = vmatmul.mubr.f32.gmra.mrb[0].mxu0 %v914
        %v991 = vpop.f32.mrb[0].mxu0
        %v992 = vadd.f32 %v911, %v991
        %v993 = vpop.f32.mrb[0].mxu0
        %994 = vmatprep.mubr.f32.mxu0 0.0
        %995 = vmatmul.mubr.f32.gmra.mrb[0].mxu0 %v917
        %v996 = vpop.f32.mrb[0].mxu0
        %v997 = vadd.f32 %v911, %v996
        %v998 = vpop.f32.mrb[0].mxu0
        %999 = vmatprep.mubr.f32.mxu0 0.0
        %1000 = vmatmul.mubr.f32.gmra.mrb[0].mxu0 %v920
        %v1001 = vpop.f32.mrb[0].mxu0
        %v1002 = vadd.f32 %v911, %v1001
        %v1003 = vpop.f32.mrb[0].mxu0
        %1004 = vmatprep.mubr.f32.mxu0 0.0
        %1005 = vmatmul.mubr.f32.gmra.mrb[0].mxu0 %v923
        %v1006 = vpop.f32.mrb[0].mxu0
        %v1007 = vadd.f32 %v911, %v1006
        %v1008 = vpop.f32.mrb[0].mxu0
        %1009 = vdwg.mxu0
        %v1010 = vsub.f32 0.0, %v992
        %v1011 = vsub.f32 0.0, %v997
        %v1012 = vsub.f32 0.0, %v1002
        %v1013 = vsub.f32 0.0, %v1007
        %v1014 = vmul.f32 %v1010, 1.442695
        %v1015 = vpow.pop %v1014
        %v1016 = vmul.f32 %v1011, 1.442695
        %v1017 = vpow.pop %v1016
        %v1018 = vmul.f32 %v1012, 1.442695
        %v1019 = vpow.pop %v1018
        %v1020 = vmul.f32 %v1013, 1.442695
        %v1021 = vpow.pop %v1020
        %v1022 = vadd.f32 %v1015, 1.0
        %v1023 = vadd.f32 %v1017, 1.0
        %v1024 = vadd.f32 %v1019, 1.0
        %v1025 = vadd.f32 %v1021, 1.0
        %v1026 = vrcp.pop %v1022
        %v1027 = vmul.f32 1.0, %v1026
        %v1028 = vrcp.pop %v1023
        %v1029 = vmul.f32 1.0, %v1028
        %v1030 = vrcp.pop %v1024
        %v1031 = vmul.f32 1.0, %v1030
        %v1032 = vrcp.pop %v1025
        %v1033 = vmul.f32 1.0, %v1032
        %vm1034 = vcmask 7168
        %1035 = vst.msk [vmem:[%s418] sm:$0xff] %vm1034, %v1027
        %1036 = vst.msk [vmem:[%s418 + $0x8] sm:$0xff] %vm1034, %v1029
        %1037 = vst.msk [vmem:[%s418 + $0x10] sm:$0xff] %vm1034, %v1031
        %1038 = vst.msk [vmem:[%s418 + $0x18] sm:$0xff] %vm1034, %v1033
        %s1039 = sand.u32 %s273, 1
        %s1040 = sand.u32 %s273, 1
        %s1041 = smul.addr %s1040, 32
        %s1042 = scalar_lea.vmem [#allocation3], %s1041
        // Predicated region
        $region65: #{tpu_custom_call.1} parent=63 // pred_check
          %p1043 = pneg %p283
        $region66: #{tpu_custom_call.1} parent=63 // pred_check_branch
          %1045 = sbr.rel (%p1043) target = $region68
        $region67: #{tpu_custom_call.1} parent=63 // pred_region
          %s1046 = smul.u32 4, %s24
          %s1047 = ssub.s32 25, %s1046
          %p1048 = scmp.lt.s32.totalorder %s1047, 4
          %s1049 = scalar_select %p1048, %s1047, 4
          %s1050 = smul.u32 128, %s1049
          %p1051 = scmp.ne.s32.totalorder 0, %s1050
          %s1052 = smul.addr %s1046, 8
          %s1053 = scalar_lea.vmem %s11, %s1052
          // Predicated region
          $region69: #{tpu_custom_call.1} parent=67 // pred_check
            %p1054 = pneg %p1051
          $region70: #{tpu_custom_call.1} parent=67 // pred_check_branch
            %1056 = sbr.rel (%p1054) target = $region72
          $region71: #{tpu_custom_call.1} parent=67 // pred_region
            // Predicated region
            $region73: #{tpu_custom_call.1} parent=71 // pred_check
              _
            $region74: #{tpu_custom_call.1} parent=71 // pred_check_branch
              %1058 = sbr.rel (0) target = $region76
            $region75: #{tpu_custom_call.1} parent=71 // pred_region
              // Predicated region
              $region95: #{tpu_custom_call.1} parent=75 // pred_check
                _
              $region96: #{tpu_custom_call.1} parent=75 // pred_check_branch
                %1113 = sbr.rel (0) target = $region98
              $region97: #{tpu_custom_call.1} parent=75 // pred_region
                %s1114 = sshrl.u32 %s1049, 2
                // While loop
                $region99: #{tpu_custom_call.1} parent=97 // loop_pre_header
                  _
                $region100: #{tpu_custom_call.1} parent=97 // loop_header
                  %s1116 = sphi 0, %s1118
                  %p1117 = scmp.ge.s32.totalorder %s1116, %s1114
                  %s1121 = sphi 0, %s1134
                  %s1122 = sphi %s1042, %s1137
                  %s1123 = sphi %s1053, %s1138
                $region101: #{tpu_custom_call.1} parent=97 // loop_header_branch
                  %1120 = sbr.rel (%p1117) target = $region105
                $region102: #{tpu_custom_call.1} parent=97 // loop_body
                  %v1124 = vld [vmem:[%s1122] sm:$0xff]
                  %1125 = vst [vmem:[%s1123] sm:$0xff] %v1124
                  %v1126 = vld [vmem:[%s1122 + $0x8] sm:$0xff]
                  %1127 = vst [vmem:[%s1123 + $0x8] sm:$0xff] %v1126
                  %v1128 = vld [vmem:[%s1122 + $0x10] sm:$0xff]
                  %1129 = vst [vmem:[%s1123 + $0x10] sm:$0xff] %v1128
                  %v1130 = vld [vmem:[%s1122 + $0x18] sm:$0xff]
                  %1131 = vst [vmem:[%s1123 + $0x18] sm:$0xff] %v1130
                  %s1132 = sadd.s32 1, %s1121
                  %p1133 = scmp.ge.s32.totalorder %s1132, %s1114
                  %s1134 = scalar_select %p1133, 0, %s1132
                  %s1135 = smul.u32 %s1134, 32
                  %s1136 = smul.u32 %s1134, 32
                  %s1137 = scalar_lea.vmem %s1042, %s1135 [#allocation3]
                  %s1138 = scalar_lea.vmem %s1053, %s1136
                $region103: #{tpu_custom_call.1} parent=97 // loop_footer
                  %s1118 = sadd.s32 %s1116, 1
                $region104: #{tpu_custom_call.1} parent=97 // loop_footer_branch
                  %1115 = sbr.rel target = $region100
                $region105: #{tpu_custom_call.1} parent=97 // loop_exit
                  _
                %s1139 = sshrl.u32 %s1049, 2
                %s1140 = sand.u32 %s1049, 3
                %s1141 = smul.u32 %s1139, 4
                %s1142 = smul.u32 8, %s1141
                %s1143 = scalar_lea.vmem %s1042, %s1142 [#allocation3]
                %s1144 = smul.u32 8, %s1141
                %s1145 = scalar_lea.vmem %s1053, %s1144
                // While loop
                $region106: #{tpu_custom_call.1} parent=97 // loop_pre_header
                  _
                $region107: #{tpu_custom_call.1} parent=97 // loop_header
                  %s1147 = sphi 0, %s1149
                  %p1148 = scmp.ge.s32.totalorder %s1147, %s1140
                  %s1152 = sphi 0, %s1159
                  %s1153 = sphi %s1143, %s1162
                  %s1154 = sphi %s1145, %s1163
                $region108: #{tpu_custom_call.1} parent=97 // loop_header_branch
                  %1151 = sbr.rel (%p1148) target = $region112
                $region109: #{tpu_custom_call.1} parent=97 // loop_body
                  %v1155 = vld [vmem:[%s1153] sm:$0xff]
                  %1156 = vst [vmem:[%s1154] sm:$0xff] %v1155
                  %s1157 = sadd.s32 1, %s1152
                  %p1158 = scmp.ge.s32.totalorder %s1157, %s1140
                  %s1159 = scalar_select %p1158, 0, %s1157
                  %s1160 = smul.u32 %s1159, 8
                  %s1161 = smul.u32 %s1159, 8
                  %s1162 = scalar_lea.vmem %s1143, %s1160 [#allocation3]
                  %s1163 = scalar_lea.vmem %s1145, %s1161
                $region110: #{tpu_custom_call.1} parent=97 // loop_footer
                  %s1149 = sadd.s32 %s1147, 1
                $region111: #{tpu_custom_call.1} parent=97 // loop_footer_branch
                  %1146 = sbr.rel target = $region107
                $region112: #{tpu_custom_call.1} parent=97 // loop_exit
                  _
              $region98: #{tpu_custom_call.1} parent=75 // pred_fallthru
                _
              // Predicated region
              $region113: #{tpu_custom_call.1} parent=75 // pred_check
                _
              $region114: #{tpu_custom_call.1} parent=75 // pred_check_branch
                %1165 = sbr.rel target = $region116
              $region115: #{tpu_custom_call.1} parent=75 // pred_region
                _
              $region116: #{tpu_custom_call.1} parent=75 // pred_fallthru
                _
            $region76: #{tpu_custom_call.1} parent=71 // pred_fallthru
              _
            // Predicated region
            $region77: #{tpu_custom_call.1} parent=71 // pred_check
              _
            $region78: #{tpu_custom_call.1} parent=71 // pred_check_branch
              %1060 = sbr.rel target = $region80
            $region79: #{tpu_custom_call.1} parent=71 // pred_region
              %s1062 = sshrl.u32 %s1049, 2
              // While loop
              $region81: #{tpu_custom_call.1} parent=79 // loop_pre_header
                _
              $region82: #{tpu_custom_call.1} parent=79 // loop_header
                %s1064 = sphi 0, %s1066
                %p1065 = scmp.ge.s32.totalorder %s1064, %s1062
                %s1069 = sphi 0, %s1082
                %s1070 = sphi %s1042, %s1085
                %s1071 = sphi %s1053, %s1086
              $region83: #{tpu_custom_call.1} parent=79 // loop_header_branch
                %1068 = sbr.rel (%p1065) target = $region87
              $region84: #{tpu_custom_call.1} parent=79 // loop_body
                %v1072 = vld [vmem:[%s1070] sm:$0xff]
                %1073 = vst [vmem:[%s1071] sm:$0xff] %v1072
                %v1074 = vld [vmem:[%s1070 + $0x8] sm:$0xff]
                %1075 = vst [vmem:[%s1071 + $0x8] sm:$0xff] %v1074
                %v1076 = vld [vmem:[%s1070 + $0x10] sm:$0xff]
                %1077 = vst [vmem:[%s1071 + $0x10] sm:$0xff] %v1076
                %v1078 = vld [vmem:[%s1070 + $0x18] sm:$0xff]
                %1079 = vst [vmem:[%s1071 + $0x18] sm:$0xff] %v1078
                %s1080 = sadd.s32 1, %s1069
                %p1081 = scmp.ge.s32.totalorder %s1080, %s1062
                %s1082 = scalar_select %p1081, 0, %s1080
                %s1083 = smul.u32 %s1082, 32
                %s1084 = smul.u32 %s1082, 32
                %s1085 = scalar_lea.vmem %s1042, %s1083 [#allocation3]
                %s1086 = scalar_lea.vmem %s1053, %s1084
              $region85: #{tpu_custom_call.1} parent=79 // loop_footer
                %s1066 = sadd.s32 %s1064, 1
              $region86: #{tpu_custom_call.1} parent=79 // loop_footer_branch
                %1063 = sbr.rel target = $region82
              $region87: #{tpu_custom_call.1} parent=79 // loop_exit
                _
              %s1087 = sshrl.u32 %s1049, 2
              %s1088 = sand.u32 %s1049, 3
              %s1089 = smul.u32 %s1087, 4
              %s1090 = smul.u32 8, %s1089
              %s1091 = scalar_lea.vmem %s1042, %s1090 [#allocation3]
              %s1092 = smul.u32 8, %s1089
              %s1093 = scalar_lea.vmem %s1053, %s1092
              // While loop
              $region88: #{tpu_custom_call.1} parent=79 // loop_pre_header
                _
              $region89: #{tpu_custom_call.1} parent=79 // loop_header
                %s1095 = sphi 0, %s1097
                %p1096 = scmp.ge.s32.totalorder %s1095, %s1088
                %s1100 = sphi 0, %s1107
                %s1101 = sphi %s1091, %s1110
                %s1102 = sphi %s1093, %s1111
              $region90: #{tpu_custom_call.1} parent=79 // loop_header_branch
                %1099 = sbr.rel (%p1096) target = $region94
              $region91: #{tpu_custom_call.1} parent=79 // loop_body
                %v1103 = vld [vmem:[%s1101] sm:$0xff]
                %1104 = vst [vmem:[%s1102] sm:$0xff] %v1103
                %s1105 = sadd.s32 1, %s1100
                %p1106 = scmp.ge.s32.totalorder %s1105, %s1088
                %s1107 = scalar_select %p1106, 0, %s1105
                %s1108 = smul.u32 %s1107, 8
                %s1109 = smul.u32 %s1107, 8
                %s1110 = scalar_lea.vmem %s1091, %s1108 [#allocation3]
                %s1111 = scalar_lea.vmem %s1093, %s1109
              $region92: #{tpu_custom_call.1} parent=79 // loop_footer
                %s1097 = sadd.s32 %s1095, 1
              $region93: #{tpu_custom_call.1} parent=79 // loop_footer_branch
                %1094 = sbr.rel target = $region89
              $region94: #{tpu_custom_call.1} parent=79 // loop_exit
                _
            $region80: #{tpu_custom_call.1} parent=71 // pred_fallthru
              _
          $region72: #{tpu_custom_call.1} parent=67 // pred_fallthru
            _
          %1166 = vnop
        $region68: #{tpu_custom_call.1} parent=63 // pred_fallthru
          _
      $region64: #{tpu_custom_call.1} parent=5 // pred_fallthru
        _
      %p1167 = scmp.le.s32.totalorder 2, %s19
      // Predicated region
      $region117: #{tpu_custom_call.1} parent=5 // pred_check
        %p1168 = pneg %p1167
      $region118: #{tpu_custom_call.1} parent=5 // pred_check_branch
        %1170 = sbr.rel (%p1168) target = $region120
      $region119: #{tpu_custom_call.1} parent=5 // pred_region
        %s1171 = ssub.s32 %s19, 2
        // Predicated region
        $region121: #{tpu_custom_call.1} parent=119 // pred_check
          %p1172 = pneg %p289
        $region122: #{tpu_custom_call.1} parent=119 // pred_check_branch
          %1174 = sbr.rel (%p1172) target = $region124
        $region123: #{tpu_custom_call.1} parent=119 // pred_region
          %s1175 = sand.u32 %s274, 1
          %s1176 = sand.u32 %s274, 1
          %s1177 = smul.addr %s1176, 32
          %s1178 = scalar_lea.vmem [#allocation3], %s1177
        $region124: #{tpu_custom_call.1} parent=119 // pred_fallthru
          _
      $region120: #{tpu_custom_call.1} parent=5 // pred_fallthru
        _
    $region6: #{tpu_custom_call.1} parent=1 // loop_footer
      %s23 = sadd.s32 1, %s19
    $region7: #{tpu_custom_call.1} parent=1 // loop_footer_branch
      %18 = sbr.rel target = $region3
    $region8: #{tpu_custom_call.1} parent=1 // loop_exit
      _

</llo_original>
